<compile_context>
chip_gen: v5e
topology: v5e:2x2
jax: 0.10.0
libtpu: 0.0.40
codegen_flags: <defaults>
</compile_context>

<pallas_src>
import jax
import jax.numpy as jnp
from jax.experimental import pallas as pl
from jax.experimental.pallas import tpu as pltpu


def _round_up(x, m):
    return (x + m - 1) // m * m


def mlp_kernel(x_ref, w1_ref, b1_ref, w2_ref, b2_ref, w3_ref, b3_ref, o_ref):
    # fc1 + ReLU.  x is f32 in HBM; cast to the matmul dtype in-kernel so the
    # wrapper does not burn an extra HBM pass on x (kernel is HBM-bound).
    x = x_ref[...].astype(w1_ref.dtype)
    h1 = jnp.dot(x, w1_ref[...], preferred_element_type=jnp.float32)
    h1 = jnp.maximum(h1 + b1_ref[...], 0.0)
    # fc2 + ReLU
    h2 = jnp.dot(h1.astype(w2_ref.dtype), w2_ref[...],
                 preferred_element_type=jnp.float32)
    h2 = jnp.maximum(h2 + b2_ref[...], 0.0)
    # fc3: class dim zero-padded to a lane-dense 128; pad lanes carry a -1e30
    # bias so they contribute exp(-huge) == 0 to the softmax.
    logits = jnp.dot(h2.astype(w3_ref.dtype), w3_ref[...],
                     preferred_element_type=jnp.float32)
    logits = logits + b3_ref[...]
    # Numerically stable softmax over dim=1 (all 128 lanes: reduces ride the
    # XLU, exp rides the EUP -- both have slack in this DMA-bound kernel).
    m = jnp.max(logits, axis=1, keepdims=True)
    e = jnp.exp(logits - m)
    denom = jnp.sum(e, axis=1, keepdims=True)
    probs = e * pl.reciprocal(denom)          # exact: rows sum to 1
    o_ref[...] = probs.astype(o_ref.dtype)    # bf16 store halves writeback


def _choose_tb(batch, tb_max):
    # Batch tile: multiple of 16 (bf16 sublane packing).  Cap so the grid has
    # >= 2 steps whenever possible, so the "parallel" batch axis can shard
    # across v7x's two TensorCores (v5e/v6e have one TC; no cost there).
    tb = min(tb_max, _round_up(batch, 16))
    if batch > 16:
        half = _round_up((batch + 1) // 2, 16)
        tb = min(tb, half)
    return max(tb, 16)


def mlp_classifier_forward(x, params, *, tb_max=2048, use_bf16=True):
    """x: (B, input_size) f32. params: (w1,b1,w2,b2,w3,b3), weights stored as
    (in_features, out_features). Returns (B, n_classes) f32 softmax probs."""
    w1, b1, w2, b2, w3, b3 = params
    B, in_features = x.shape
    h1_dim = w1.shape[1]
    h2_dim = w2.shape[1]
    n_classes = w3.shape[1]

    # ---- lane-dense class padding (3 -> 128): unmasked vst / reduces ----
    nc_pad = _round_up(max(n_classes, 128), 128)
    w3p = jnp.pad(w3, ((0, 0), (0, nc_pad - n_classes)))
    b3p = jnp.pad(b3, ((0, 0), (0, nc_pad - n_classes)), constant_values=-1e30)

    # ---- batch tiling: no wrapper pad; Pallas clips the ragged last block ----
    tb = _choose_tb(B, tb_max)
    n_blocks = pl.cdiv(B, tb)
    b_pad = n_blocks * tb          # output rows (tail sliced off under jit)

    # ---- dtypes: bf16 MXU operands (cast of x happens in-kernel), f32 bias ----
    mm_dtype = jnp.bfloat16 if use_bf16 else jnp.float32
    out_dtype = jnp.bfloat16 if use_bf16 else jnp.float32
    w1k, w2k, w3k = (w.astype(mm_dtype) for w in (w1, w2, w3p))
    b1k, b2k, b3k = (b.astype(jnp.float32) for b in (b1, b2, b3p))

    def resident(a):   # weights / biases stay resident in VMEM across steps
        return pl.BlockSpec(a.shape, lambda i: (0, 0))

    flops = 2 * b_pad * (in_features * h1_dim + h1_dim * h2_dim + h2_dim * nc_pad)
    bytes_accessed = (
        x.size * x.dtype.itemsize
        + sum(a.size * a.dtype.itemsize for a in (w1k, b1k, w2k, b2k, w3k, b3k))
        + b_pad * nc_pad * jnp.dtype(out_dtype).itemsize
    )
    cost = pl.CostEstimate(
        flops=flops,
        transcendentals=b_pad * (nc_pad + 1),   # exp per lane + recip per row
        bytes_accessed=bytes_accessed,
    )

    out = pl.pallas_call(
        mlp_kernel,
        out_shape=jax.ShapeDtypeStruct((b_pad, nc_pad), out_dtype),
        grid=(n_blocks,),
        in_specs=[
            pl.BlockSpec((tb, in_features), lambda i: (i, 0)),
            resident(w1k), resident(b1k),
            resident(w2k), resident(b2k),
            resident(w3k), resident(b3k),
        ],
        out_specs=pl.BlockSpec((tb, nc_pad), lambda i: (i, 0)),
        compiler_params=pltpu.CompilerParams(
            dimension_semantics=("parallel",),
            vmem_limit_bytes=32 * 1024 * 1024,
        ),
        cost_estimate=cost,
    )(x, w1k, b1k, w2k, b2k, w3k, b3k)

    # Slice + cast under the caller's jit: reads only B*n_classes elements.
    return out[:B, :n_classes].astype(jnp.float32)


def init_params(key, input_size):
    # Deterministic init mimicking nn.Linear's U(-1/sqrt(fan_in), 1/sqrt(fan_in)).
    # Weights stored as (in_features, out_features) so the kernel does x @ W + b.
    dims = [(input_size, 128), (128, 64), (64, 3)]
    params = []
    for fan_in, fan_out in dims:
        key, kw, kb = jax.random.split(key, 3)
        bound = 1.0 / jnp.sqrt(fan_in)
        w = jax.random.uniform(kw, (fan_in, fan_out), jnp.float32, -bound, bound)
        b = jax.random.uniform(kb, (1, fan_out), jnp.float32, -bound, bound)
        params += [w, b]
    return tuple(params)


if __name__ == "__main__":
    key = jax.random.PRNGKey(0)
    key, kx = jax.random.split(key)

    batch = 8
    input_size = 32
    x = jax.random.normal(kx, (batch, input_size), jnp.float32)
    params = init_params(key, input_size)

    fwd = jax.jit(mlp_classifier_forward)
    out = jax.block_until_ready(fwd(x, params))

    assert out.shape == (batch, 3)
    assert out.dtype == jnp.float32
    # Softmax rows sum to ~1 (exact reciprocal; bf16 output quantization budget).
    assert jnp.allclose(jnp.sum(out, axis=1), 1.0, atol=1e-2)

    w1, b1, w2, b2, w3, b3 = params

    # Reference with matched bf16 matmul operands / f32 accumulation.
    def ref_fwd(cast_dtype):
        xb = x.astype(cast_dtype)
        h = jnp.maximum(
            jnp.dot(xb, w1.astype(cast_dtype),
                    preferred_element_type=jnp.float32) + b1, 0.0)
        h = jnp.maximum(
            jnp.dot(h.astype(cast_dtype), w2.astype(cast_dtype),
                    preferred_element_type=jnp.float32) + b2, 0.0)
        logits = jnp.dot(h.astype(cast_dtype), w3.astype(cast_dtype),
                         preferred_element_type=jnp.float32) + b3
        return jax.nn.softmax(logits, axis=1)

    ref_bf16 = ref_fwd(jnp.bfloat16)
    ref_f32 = ref_fwd(jnp.float32)
    assert jnp.allclose(out, ref_bf16, atol=1e-2)   # bf16 output quantization
    assert jnp.allclose(out, ref_f32, atol=5e-2)    # bf16 operand quantization

    print("KERNEL_OK")
</pallas_src>

<mosaic_0001>
module attributes {stable_mosaic.version = 11 : i64} {
  func.func @mlp_kernel(%arg0: i32, %arg1: memref<16x32xf32, #tpu.memory_space<vmem>>, %arg2: memref<32x128xbf16, #tpu.memory_space<vmem>>, %arg3: memref<1x128xf32, #tpu.memory_space<vmem>>, %arg4: memref<128x64xbf16, #tpu.memory_space<vmem>>, %arg5: memref<1x64xf32, #tpu.memory_space<vmem>>, %arg6: memref<64x128xbf16, #tpu.memory_space<vmem>>, %arg7: memref<1x128xf32, #tpu.memory_space<vmem>>, %arg8: memref<16x128xbf16, #tpu.memory_space<vmem>>) attributes {dimension_semantics = [#tpu.dimension_semantics<parallel>], iteration_bounds = array<i64: 1>, scalar_prefetch = 0 : i64, scratch_operands = 0 : i64, tpu.core_type = #tpu.core_type<tc>, window_params = [{transform_indices = @transform_0, window_bounds = array<i64: 16, 32>}, {pipeline_mode = #tpu.pipeline_mode<synchronous>, transform_indices = @transform_1, window_bounds = array<i64: 32, 128>}, {pipeline_mode = #tpu.pipeline_mode<synchronous>, transform_indices = @transform_2, window_bounds = array<i64: 1, 128>}, {pipeline_mode = #tpu.pipeline_mode<synchronous>, transform_indices = @transform_3, window_bounds = array<i64: 128, 64>}, {pipeline_mode = #tpu.pipeline_mode<synchronous>, transform_indices = @transform_4, window_bounds = array<i64: 1, 64>}, {pipeline_mode = #tpu.pipeline_mode<synchronous>, transform_indices = @transform_5, window_bounds = array<i64: 64, 128>}, {pipeline_mode = #tpu.pipeline_mode<synchronous>, transform_indices = @transform_6, window_bounds = array<i64: 1, 128>}, {transform_indices = @transform_7, window_bounds = array<i64: 16, 128>}]} {
    %c0 = arith.constant 0 : index
    %c0_0 = arith.constant 0 : index
    %0 = vector.load %arg1[%c0, %c0_0] : memref<16x32xf32, #tpu.memory_space<vmem>>, vector<16x32xf32>
    %1 = arith.truncf %0 : vector<16x32xf32> to vector<16x32xbf16>
    %c0_1 = arith.constant 0 : index
    %c0_2 = arith.constant 0 : index
    %2 = vector.load %arg2[%c0_1, %c0_2] : memref<32x128xbf16, #tpu.memory_space<vmem>>, vector<32x128xbf16>
    %cst = arith.constant dense<0.000000e+00> : vector<16x128xf32>
    %3 = tpu.matmul %1, %2, %cst {dimension_numbers = #tpu.dot_dimension_numbers<[1], [0], [0], [1], [0, 0, 1, 1], [], []>} : vector<16x32xbf16>, vector<32x128xbf16>, vector<16x128xf32> -> vector<16x128xf32>
    %c0_3 = arith.constant 0 : index
    %c0_4 = arith.constant 0 : index
    %4 = vector.load %arg3[%c0_3, %c0_4] : memref<1x128xf32, #tpu.memory_space<vmem>>, vector<1x128xf32>
    %5 = vector.broadcast %4 : vector<1x128xf32> to vector<16x128xf32>
    %6 = arith.addf %3, %5 : vector<16x128xf32>
    %cst_5 = arith.constant 0.000000e+00 : f32
    %7 = vector.broadcast %cst_5 : f32 to vector<16x128xf32>
    %8 = arith.maximumf %6, %7 : vector<16x128xf32>
    %9 = arith.truncf %8 : vector<16x128xf32> to vector<16x128xbf16>
    %c0_6 = arith.constant 0 : index
    %c0_7 = arith.constant 0 : index
    %10 = vector.load %arg4[%c0_6, %c0_7] : memref<128x64xbf16, #tpu.memory_space<vmem>>, vector<128x64xbf16>
    %cst_8 = arith.constant dense<0.000000e+00> : vector<16x64xf32>
    %11 = tpu.matmul %9, %10, %cst_8 {dimension_numbers = #tpu.dot_dimension_numbers<[1], [0], [0], [1], [0, 0, 1, 1], [], []>} : vector<16x128xbf16>, vector<128x64xbf16>, vector<16x64xf32> -> vector<16x64xf32>
    %c0_9 = arith.constant 0 : index
    %c0_10 = arith.constant 0 : index
    %12 = vector.load %arg5[%c0_9, %c0_10] : memref<1x64xf32, #tpu.memory_space<vmem>>, vector<1x64xf32>
    %13 = vector.broadcast %12 : vector<1x64xf32> to vector<16x64xf32>
    %14 = arith.addf %11, %13 : vector<16x64xf32>
    %cst_11 = arith.constant 0.000000e+00 : f32
    %15 = vector.broadcast %cst_11 : f32 to vector<16x64xf32>
    %16 = arith.maximumf %14, %15 : vector<16x64xf32>
    %17 = arith.truncf %16 : vector<16x64xf32> to vector<16x64xbf16>
    %c0_12 = arith.constant 0 : index
    %c0_13 = arith.constant 0 : index
    %18 = vector.load %arg6[%c0_12, %c0_13] : memref<64x128xbf16, #tpu.memory_space<vmem>>, vector<64x128xbf16>
    %cst_14 = arith.constant dense<0.000000e+00> : vector<16x128xf32>
    %19 = tpu.matmul %17, %18, %cst_14 {dimension_numbers = #tpu.dot_dimension_numbers<[1], [0], [0], [1], [0, 0, 1, 1], [], []>} : vector<16x64xbf16>, vector<64x128xbf16>, vector<16x128xf32> -> vector<16x128xf32>
    %c0_15 = arith.constant 0 : index
    %c0_16 = arith.constant 0 : index
    %20 = vector.load %arg7[%c0_15, %c0_16] : memref<1x128xf32, #tpu.memory_space<vmem>>, vector<1x128xf32>
    %21 = vector.broadcast %20 : vector<1x128xf32> to vector<16x128xf32>
    %22 = arith.addf %19, %21 : vector<16x128xf32>
    %cst_17 = arith.constant dense<0xFF800000> : vector<16xf32>
    %23 = vector.multi_reduction <maximumf>, %22, %cst_17 [1] : vector<16x128xf32> to vector<16xf32>
    %24 = vector.shape_cast %23 : vector<16xf32> to vector<16x1xf32>
    %25 = vector.broadcast %24 : vector<16x1xf32> to vector<16x128xf32>
    %26 = arith.subf %22, %25 : vector<16x128xf32>
    %27 = math.exp %26 : vector<16x128xf32>
    %cst_18 = arith.constant dense<0.000000e+00> : vector<16xf32>
    %28 = vector.multi_reduction <add>, %27, %cst_18 [1] : vector<16x128xf32> to vector<16xf32>
    %29 = vector.shape_cast %28 : vector<16xf32> to vector<16x1xf32>
    %30 = tpu.reciprocal %29 : vector<16x1xf32> -> vector<16x1xf32>
    %31 = vector.broadcast %30 : vector<16x1xf32> to vector<16x128xf32>
    %32 = arith.mulf %27, %31 : vector<16x128xf32>
    %33 = arith.truncf %32 : vector<16x128xf32> to vector<16x128xbf16>
    %c0_19 = arith.constant 0 : index
    %c0_20 = arith.constant 0 : index
    %34 = vector.load %arg8[%c0_19, %c0_20] : memref<16x128xbf16, #tpu.memory_space<vmem>>, vector<16x128xbf16>
    tpu.vector_store %arg8[%c0_19, %c0_20], %33 {strides = array<i32>} : memref<16x128xbf16, #tpu.memory_space<vmem>>, vector<16x128xbf16>,
    return
  }
  func.func @transform_0(%arg0: i32) -> (i32, i32) {
    %c0_i32 = arith.constant 0 : i32
    %c0_i32_0 = arith.constant 0 : i32
    return %arg0, %c0_i32 : i32, i32
  }
  func.func @transform_1(%arg0: i32) -> (i32, i32) {
    %c0_i32 = arith.constant 0 : i32
    %c0_i32_0 = arith.constant 0 : i32
    %c0_i32_1 = arith.constant 0 : i32
    return %c0_i32, %c0_i32_0 : i32, i32
  }
  func.func @transform_2(%arg0: i32) -> (i32, i32) {
    %c0_i32 = arith.constant 0 : i32
    %c0_i32_0 = arith.constant 0 : i32
    %c0_i32_1 = arith.constant 0 : i32
    return %c0_i32, %c0_i32_0 : i32, i32
  }
  func.func @transform_3(%arg0: i32) -> (i32, i32) {
    %c0_i32 = arith.constant 0 : i32
    %c0_i32_0 = arith.constant 0 : i32
    %c0_i32_1 = arith.constant 0 : i32
    return %c0_i32, %c0_i32_0 : i32, i32
  }
  func.func @transform_4(%arg0: i32) -> (i32, i32) {
    %c0_i32 = arith.constant 0 : i32
    %c0_i32_0 = arith.constant 0 : i32
    %c0_i32_1 = arith.constant 0 : i32
    return %c0_i32, %c0_i32_0 : i32, i32
  }
  func.func @transform_5(%arg0: i32) -> (i32, i32) {
    %c0_i32 = arith.constant 0 : i32
    %c0_i32_0 = arith.constant 0 : i32
    %c0_i32_1 = arith.constant 0 : i32
    return %c0_i32, %c0_i32_0 : i32, i32
  }
  func.func @transform_6(%arg0: i32) -> (i32, i32) {
    %c0_i32 = arith.constant 0 : i32
    %c0_i32_0 = arith.constant 0 : i32
    %c0_i32_1 = arith.constant 0 : i32
    return %c0_i32, %c0_i32_0 : i32, i32
  }
  func.func @transform_7(%arg0: i32) -> (i32, i32) {
    %c0_i32 = arith.constant 0 : i32
    %c0_i32_0 = arith.constant 0 : i32
    return %arg0, %c0_i32 : i32, i32
  }
}

</mosaic_0001>

<llo_original>
// kernel: mlp_classifier_forward.1
$region0: #{mlp_classifier_forward.1}
  #allocation0 [shape = 'u32[]', space=smem, size = 0x4, offset = 0x4, fixed_abs, tag = 'smem constant byte address 0x4 - core index']
  #allocation1 [shape = 'u32[72,128]{1,0:T(1,128)}', space=vmem, size = 0x9000, scoped, tag = 'internal scratch']
  %s0 = inlined_call_operand.vmem [shape: f32[8,32], index: 0, kind: input, shape index: {}]
  %s1 = inlined_call_operand.vmem [shape: bf16[32,128], index: 1, kind: input, shape index: {}]
  %s2 = inlined_call_operand.vmem [shape: f32[1,128], index: 2, kind: input, shape index: {}]
  %s3 = inlined_call_operand.vmem [shape: bf16[128,64], index: 3, kind: input, shape index: {}]
  %s4 = inlined_call_operand.vmem [shape: f32[1,64], index: 4, kind: input, shape index: {}]
  %s5 = inlined_call_operand.vmem [shape: bf16[64,128], index: 5, kind: input, shape index: {}]
  %s6 = inlined_call_operand.vmem [shape: f32[1,128], index: 6, kind: input, shape index: {}]
  %s7 = inlined_call_operand.vmem [shape: bf16[16,128], index: 7, kind: output, shape index: {}]
  %s8 = sld [smem:[#allocation0]]
  $region38: #{mlp_classifier_forward.1} parent=0
    _
  %s10 = ssub.s32 1, %s8
  %s11 = scalar_select 0, %s10, %s8
  // Predicated region
  $region2: #{mlp_classifier_forward.1} parent=0 // pred_check
    _
  $region3: #{mlp_classifier_forward.1} parent=0 // pred_check_branch
    %13 = sbr.rel (0) target = $region5
  $region4: #{mlp_classifier_forward.1} parent=0 // pred_region
    _
  $region5: #{mlp_classifier_forward.1} parent=0 // pred_fallthru
    _
  // Predicated region
  $region6: #{mlp_classifier_forward.1} parent=0 // pred_check
    _
  $region7: #{mlp_classifier_forward.1} parent=0 // pred_check_branch
    %15 = sbr.rel (0) target = $region9
  $region8: #{mlp_classifier_forward.1} parent=0 // pred_region
    _
  $region9: #{mlp_classifier_forward.1} parent=0 // pred_fallthru
    _
  // Predicated region
  $region10: #{mlp_classifier_forward.1} parent=0 // pred_check
    _
  $region11: #{mlp_classifier_forward.1} parent=0 // pred_check_branch
    %17 = sbr.rel (0) target = $region13
  $region12: #{mlp_classifier_forward.1} parent=0 // pred_region
    _
  $region13: #{mlp_classifier_forward.1} parent=0 // pred_fallthru
    _
  // Predicated region
  $region14: #{mlp_classifier_forward.1} parent=0 // pred_check
    _
  $region15: #{mlp_classifier_forward.1} parent=0 // pred_check_branch
    %19 = sbr.rel (0) target = $region17
  $region16: #{mlp_classifier_forward.1} parent=0 // pred_region
    _
  $region17: #{mlp_classifier_forward.1} parent=0 // pred_fallthru
    _
  // Predicated region
  $region18: #{mlp_classifier_forward.1} parent=0 // pred_check
    _
  $region19: #{mlp_classifier_forward.1} parent=0 // pred_check_branch
    %21 = sbr.rel (0) target = $region21
  $region20: #{mlp_classifier_forward.1} parent=0 // pred_region
    _
  $region21: #{mlp_classifier_forward.1} parent=0 // pred_fallthru
    _
  // Predicated region
  $region22: #{mlp_classifier_forward.1} parent=0 // pred_check
    _
  $region23: #{mlp_classifier_forward.1} parent=0 // pred_check_branch
    %23 = sbr.rel (0) target = $region25
  $region24: #{mlp_classifier_forward.1} parent=0 // pred_region
    _
  $region25: #{mlp_classifier_forward.1} parent=0 // pred_fallthru
    _
  // Predicated region
  $region26: #{mlp_classifier_forward.1} parent=0 // pred_check
    _
  $region27: #{mlp_classifier_forward.1} parent=0 // pred_check_branch
    %25 = sbr.rel (0) target = $region29
  $region28: #{mlp_classifier_forward.1} parent=0 // pred_region
    _
  $region29: #{mlp_classifier_forward.1} parent=0 // pred_fallthru
    _
  %v27 = vld [vmem:[%s0] sm:$0xff]
  %v28 = vld [vmem:[%s0 + $0x8] sm:$0xff]
  %v29 = vpack.c.bf16 %v28, %v27
  %v30 = vld [vmem:[%s1] sm:$0xf]
  %v31 = vld [vmem:[%s1 + $0x4] sm:$0xf]
  %v32 = vld [vmem:[%s1 + $0x8] sm:$0xf]
  %v33 = vld [vmem:[%s1 + $0xc] sm:$0xf]
  %v34 = vld [vmem:[%s2] sm:$0x1]
  %v36 = vperm.slane %v34, 0
  %v42 = vunpack.c.l.b16 %v30
  %v43 = vunpack.c.l.b16 %v31
  %v44 = vunpack.c.l.b16 %v32
  %v45 = vunpack.c.l.b16 %v33
  %v46 = vpack.c.b16 %v43, %v42
  %v47 = vpack.c.b16 %v45, %v44
  %vm50 = vcmask 261120
  %v52 = vsel %vm50, %v29, 0
  %54 = vmatpush.bf16.msra.mxu0 0
  %55 = vmatpush.bf16.msra.mxu0 0
  %56 = vmatpush.bf16.msra.mxu0 0
  %57 = vmatpush.bf16.msra.mxu0 0
  %58 = vmatpush.bf16.msra.mxu0 0
  %59 = vmatpush.bf16.msra.mxu0 0
  %60 = vmatpush.bf16.msra.mxu0 %v47
  %61 = vmatpush.bf16.msra.mxu0 %v46
  %62 = vmatmul.bf16.gmra.mxu0 %v52
  %v63 = vpop.f32.mrf.mxu0
  %v64 = vadd.f32 %v36, %v63
  %v65 = vpop.f32.mrf.mxu0
  %v66 = vadd.f32 %v36, %v65
  %67 = vdwg.mxu0
  %v68 = vmax.f32 %v64, 0.0
  %v69 = vmax.f32 %v66, 0.0
  %v70 = vpack.c.bf16 %v69, %v68
  %v71 = vld [vmem:[%s3] sm:$0xf]
  %v72 = vld [vmem:[%s3 + $0x4] sm:$0xf]
  %v73 = vld [vmem:[%s3 + $0x8] sm:$0xf]
  %v74 = vld [vmem:[%s3 + $0xc] sm:$0xf]
  %v75 = vld [vmem:[%s3 + $0x10] sm:$0xf]
  %v76 = vld [vmem:[%s3 + $0x14] sm:$0xf]
  %v77 = vld [vmem:[%s3 + $0x18] sm:$0xf]
  %v78 = vld [vmem:[%s3 + $0x1c] sm:$0xf]
  %v79 = vld [vmem:[%s3 + $0x20] sm:$0xf]
  %v80 = vld [vmem:[%s3 + $0x24] sm:$0xf]
  %v81 = vld [vmem:[%s3 + $0x28] sm:$0xf]
  %v82 = vld [vmem:[%s3 + $0x2c] sm:$0xf]
  %v83 = vld [vmem:[%s3 + $0x30] sm:$0xf]
  %v84 = vld [vmem:[%s3 + $0x34] sm:$0xf]
  %v85 = vld [vmem:[%s3 + $0x38] sm:$0xf]
  %v86 = vld [vmem:[%s3 + $0x3c] sm:$0xf]
  %v87 = vld [vmem:[%s4] sm:$0x1]
  %v89 = vperm.slane %v87, 0
  %v107 = vunpack.c.l.b16 %v71
  %v108 = vunpack.c.l.b16 %v72
  %v109 = vunpack.c.l.b16 %v73
  %v110 = vunpack.c.l.b16 %v74
  %v111 = vunpack.c.l.b16 %v75
  %v112 = vunpack.c.l.b16 %v76
  %v113 = vunpack.c.l.b16 %v77
  %v114 = vunpack.c.l.b16 %v78
  %v115 = vunpack.c.l.b16 %v79
  %v116 = vunpack.c.l.b16 %v80
  %v117 = vunpack.c.l.b16 %v81
  %v118 = vunpack.c.l.b16 %v82
  %v119 = vunpack.c.l.b16 %v83
  %v120 = vunpack.c.l.b16 %v84
  %v121 = vunpack.c.l.b16 %v85
  %v122 = vunpack.c.l.b16 %v86
  %v123 = vpack.c.b16 %v108, %v107
  %v124 = vpack.c.b16 %v110, %v109
  %v125 = vpack.c.b16 %v112, %v111
  %v126 = vpack.c.b16 %v114, %v113
  %v127 = vpack.c.b16 %v116, %v115
  %v128 = vpack.c.b16 %v118, %v117
  %v129 = vpack.c.b16 %v120, %v119
  %v130 = vpack.c.b16 %v122, %v121
  %139 = vmatpush.bf16.msra.mxu0 %v130
  %140 = vmatpush.bf16.msra.mxu0 %v129
  %141 = vmatpush.bf16.msra.mxu0 %v128
  %142 = vmatpush.bf16.msra.mxu0 %v127
  %143 = vmatpush.bf16.msra.mxu0 %v126
  %144 = vmatpush.bf16.msra.mxu0 %v125
  %145 = vmatpush.bf16.msra.mxu0 %v124
  %146 = vmatpush.bf16.msra.mxu0 %v123
  %147 = vmatmul.bf16.gmra.mxu0 %v70
  %v148 = vpop.f32.mrf.mxu0
  %v149 = vadd.f32 %v89, %v148
  %v150 = vpop.f32.mrf.mxu0
  %v151 = vadd.f32 %v89, %v150
  %152 = vdwg.mxu0
  %v153 = vmax.f32 %v149, 0.0
  %v154 = vmax.f32 %v151, 0.0
  %v155 = vpack.c.bf16 %v154, %v153
  %v156 = vld [vmem:[%s5] sm:$0xf]
  %v157 = vld [vmem:[%s5 + $0x4] sm:$0xf]
  %v158 = vld [vmem:[%s5 + $0x8] sm:$0xf]
  %v159 = vld [vmem:[%s5 + $0xc] sm:$0xf]
  %v160 = vld [vmem:[%s5 + $0x10] sm:$0xf]
  %v161 = vld [vmem:[%s5 + $0x14] sm:$0xf]
  %v162 = vld [vmem:[%s5 + $0x18] sm:$0xf]
  %v163 = vld [vmem:[%s5 + $0x1c] sm:$0xf]
  %v164 = vld [vmem:[%s6] sm:$0x1]
  %v166 = vperm.slane %v164, 0
  %v176 = vunpack.c.l.b16 %v156
  %v177 = vunpack.c.l.b16 %v157
  %v178 = vunpack.c.l.b16 %v158
  %v179 = vunpack.c.l.b16 %v159
  %v180 = vunpack.c.l.b16 %v160
  %v181 = vunpack.c.l.b16 %v161
  %v182 = vunpack.c.l.b16 %v162
  %v183 = vunpack.c.l.b16 %v163
  %v184 = vpack.c.b16 %v177, %v176
  %v185 = vpack.c.b16 %v179, %v178
  %v186 = vpack.c.b16 %v181, %v180
  %v187 = vpack.c.b16 %v183, %v182
  %vm192 = vcmask 523264
  %v194 = vsel %vm192, %v155, 0
  %196 = vmatpush.bf16.msra.mxu0 0
  %197 = vmatpush.bf16.msra.mxu0 0
  %198 = vmatpush.bf16.msra.mxu0 0
  %199 = vmatpush.bf16.msra.mxu0 0
  %200 = vmatpush.bf16.msra.mxu0 %v187
  %201 = vmatpush.bf16.msra.mxu0 %v186
  %202 = vmatpush.bf16.msra.mxu0 %v185
  %203 = vmatpush.bf16.msra.mxu0 %v184
  %204 = vmatmul.bf16.gmra.mxu0 %v194
  %v205 = vpop.f32.mrf.mxu0
  %v206 = vadd.f32 %v166, %v205
  %v207 = vpop.f32.mrf.mxu0
  %v208 = vadd.f32 %v166, %v207
  %209 = vdwg.mxu0
  %210 = vmax.xlane.f32.xlu0 %v206
  %v211 = vpop.xlane.xlu0 %210
  %212 = vmax.xlane.f32.xlu0 %v208
  %v213 = vpop.xlane.xlu0 %212
  %v214 = vsub.f32 %v206, %v211
  %v215 = vsub.f32 %v208, %v213
  %v216 = vmul.f32 %v214, 1.442695
  %v217 = vpow.pop %v216
  %v218 = vmul.f32 %v215, 1.442695
  %v219 = vpow.pop %v218
  %220 = vadd.xlane.f32.xlu0 %v217
  %v221 = vpop.xlane.xlu0 %220
  %222 = vadd.xlane.f32.xlu0 %v219
  %v223 = vpop.xlane.xlu0 %222
  %v224 = vrcp.pop %v221
  %v225 = vmul.f32 %v221, %v224
  %v226 = vsub.f32 1.0, %v225
  %v227 = vmul.f32 %v224, %v226
  %v228 = vadd.f32 %v224, %v227
  %vm229 = vweird.f32 %v221
  %vm230 = vweird.f32 %v224
  %vm231 = vmor %vm229, %vm230
  %v232 = vsel %vm231, %v224, %v228
  %v233 = vand.u32 2147483647, %v221
  %vm234 = vcmp.eq.f32.partialorder %v233, 8.507059e+37
  %v235 = vand.u32 %v221, 2147483648
  %v236 = vor.u32 1.1754944e-38, %v235
  %v237 = vsel %vm234, %v236, %v232
  %v238 = vrcp.pop %v223
  %v239 = vmul.f32 %v223, %v238
  %v240 = vsub.f32 1.0, %v239
  %v241 = vmul.f32 %v238, %v240
  %v242 = vadd.f32 %v238, %v241
  %vm243 = vweird.f32 %v223
  %vm244 = vweird.f32 %v238
  %vm245 = vmor %vm243, %vm244
  %v246 = vsel %vm245, %v238, %v242
  %v247 = vand.u32 2147483647, %v223
  %vm248 = vcmp.eq.f32.partialorder %v247, 8.507059e+37
  %v249 = vand.u32 %v223, 2147483648
  %v250 = vor.u32 1.1754944e-38, %v249
  %v251 = vsel %vm248, %v250, %v246
  %v252 = vmul.f32 %v217, %v237
  %v253 = vmul.f32 %v219, %v251
  %v254 = vpack.c.bf16 %v252, %v252
  %v255 = vpack.c.bf16 %v253, %v253
  %256 = vst [vmem:[%s7] sm:$0xf] %v254
  %257 = vst [vmem:[%s7 + $0x4] sm:$0xf] %v255
  // Predicated region
  $region30: #{mlp_classifier_forward.1} parent=0 // pred_check
    _
  $region31: #{mlp_classifier_forward.1} parent=0 // pred_check_branch
    %259 = sbr.rel (0) target = $region33
  $region32: #{mlp_classifier_forward.1} parent=0 // pred_region
    _
  $region33: #{mlp_classifier_forward.1} parent=0 // pred_fallthru
    _
  // Predicated region
  $region34: #{mlp_classifier_forward.1} parent=0 // pred_check
    _
  $region35: #{mlp_classifier_forward.1} parent=0 // pred_check_branch
    %261 = sbr.rel (0) target = $region37
  $region36: #{mlp_classifier_forward.1} parent=0 // pred_region
    _
  $region37: #{mlp_classifier_forward.1} parent=0 // pred_fallthru
    _

</llo_original>
